<compile_context>
chip_gen: v6e
topology: v6e:2x2x1
jax: 0.10.0
libtpu: 0.0.40
codegen_flags: <defaults>
</compile_context>

<pallas_src>
import functools

import jax
import jax.numpy as jnp
from jax.experimental import pallas as pl
from jax.experimental.pallas import tpu as pltpu

_LANE = 128    # TPU lane width (last vreg dim)
_SUBLANE = 8   # f32 sublane count (second-to-last vreg dim)


def _round_up(n, m):
    return pl.cdiv(n, m) * m


def qnetwork_kernel(xt_ref, w1_ref, w2_ref, o_ref):
    """One batch tile; batch stays on the lane axis throughout.

    xt_ref: [S, tb]      activation tile (batch on lanes)
    w1_ref: [H, S]       layer-1 weight, nn.Linear [out, in] layout (VMEM-resident)
    w2_ref: [A_pad, H]   layer-2 weight, nn.Linear [out, in] layout, A padded to 8
    o_ref : [A_pad, tb]  transposed output tile (lane-dense store)
    """
    # hT = W1 @ xT : [H, tb]; f32 accumulation on the MXU.
    h = jnp.dot(w1_ref[...], xt_ref[...], preferred_element_type=jnp.float32)
    h = jnp.maximum(h, 0.0)
    # outT = W2 @ hT : [A_pad, tb]
    out = jnp.dot(w2_ref[...], h.astype(w2_ref.dtype),
                  preferred_element_type=jnp.float32)
    o_ref[...] = out.astype(o_ref.dtype)


def _qnetwork_pallas(x_t, w1, w2_pad, *, block_b):
    """Core transposed-layout launch.

    x_t: [S, B], w1: [H, S], w2_pad: [A_pad, H]  ->  out_t: [A_pad, B]
    """
    S, B = x_t.shape
    H, S2 = w1.shape
    A_pad, H2 = w2_pad.shape
    assert S == S2 and H == H2 and A_pad % _SUBLANE == 0

    # Batch tile on the lane axis: multiple of 128, large enough to amortize
    # per-grid-step overhead, but capped so v7x's 2 TensorCores get at least
    # 2 grid steps to shard over (no-op on v5e/v6e).
    b_lanes = _round_up(max(B, 1), _LANE)
    tb = min(_round_up(block_b, _LANE), b_lanes)
    if b_lanes >= 2 * _LANE:
        tb = min(tb, _round_up(pl.cdiv(b_lanes, 2), _LANE))
    grid = (pl.cdiv(B, tb),)

    return pl.pallas_call(
        qnetwork_kernel,
        out_shape=jax.ShapeDtypeStruct((A_pad, B), x_t.dtype),
        grid=grid,
        in_specs=[
            # Activations: one lane-tile of batch per step (double-buffered).
            pl.BlockSpec((S, tb), lambda i: (0, i)),
            # Weights: same block every step -> stay resident in VMEM.
            pl.BlockSpec((H, S), lambda i: (0, 0)),
            pl.BlockSpec((A_pad, H), lambda i: (0, 0)),
        ],
        out_specs=pl.BlockSpec((A_pad, tb), lambda i: (0, i)),
        compiler_params=pltpu.CompilerParams(
            dimension_semantics=("parallel",)),
    )(x_t, w1, w2_pad)


@functools.partial(jax.jit, static_argnames=("block_b",))
def qnetwork_forward(x, w1, w2, *, block_b=8192):
    """QNetwork forward: relu(x @ W1^T) @ W2^T (bias-free, as in the module).

    x : [B, S]   activations (PyTorch layout)
    w1: [H, S]   nn.Linear weight ([out_features, in_features])
    w2: [A, H]   nn.Linear weight
    returns [B, A]
    """
    A = w2.shape[0]
    a_pad = _round_up(A, _SUBLANE)
    if a_pad != A:
        # Tiny (A x H) pad so the output tile is a whole number of sublanes.
        # TODO(synk): pre-pad W2 once at init to avoid this per-call op.
        w2 = jnp.pad(w2, ((0, a_pad - A), (0, 0)))
    # Batch goes on the lane axis: feed activations transposed.  Callers that
    # already hold activations as [S, B] can call _qnetwork_pallas directly
    # and skip both transposes.
    out_t = _qnetwork_pallas(x.T, w1, w2, block_b=block_b)   # [A_pad, B]
    return out_t[:A].T                                        # [B, A]


def init_qnetwork_params(key, state_space, hidden_dim, action_space,
                         dtype=jnp.float32):
    """nn.Linear-style init (U[-1/sqrt(fan_in), +1/sqrt(fan_in)], bias=False),
    in the native [out_features, in_features] layout the kernel consumes."""
    k1, k2 = jax.random.split(key)
    b1 = 1.0 / jnp.sqrt(jnp.float32(state_space))
    b2 = 1.0 / jnp.sqrt(jnp.float32(hidden_dim))
    w1 = jax.random.uniform(k1, (hidden_dim, state_space),
                            dtype=dtype, minval=-b1, maxval=b1)
    w2 = jax.random.uniform(k2, (action_space, hidden_dim),
                            dtype=dtype, minval=-b2, maxval=b2)
    return w1, w2


if __name__ == "__main__":
    # Shapes consistent with the module (CartPole-like env, default hidden_dim):
    # state_space=4, action_space=2, hidden_dim=100, batch=2.
    batch, state_space, hidden_dim, action_space = 2, 4, 100, 2

    key = jax.random.PRNGKey(0)
    kx, kp, kb = jax.random.split(key, 3)
    x = jax.random.normal(kx, (batch, state_space), dtype=jnp.float32)
    w1, w2 = init_qnetwork_params(kp, state_space, hidden_dim, action_space)

    # --- small-batch check (single ragged tile, masked edge write) ---
    out = jax.block_until_ready(qnetwork_forward(x, w1, w2))
    ref = jnp.maximum(x @ w1.T, 0.0) @ w2.T
    assert out.shape == (batch, action_space)
    assert jnp.allclose(out, ref, atol=1e-5, rtol=1e-5)

    # --- larger non-lane-aligned batch: multi-tile grid + ragged last tile ---
    big_b = 1000
    xb = jax.random.normal(kb, (big_b, state_space), dtype=jnp.float32)
    out_big = jax.block_until_ready(qnetwork_forward(xb, w1, w2))
    ref_big = jnp.maximum(xb @ w1.T, 0.0) @ w2.T
    assert out_big.shape == (big_b, action_space)
    assert jnp.allclose(out_big, ref_big, atol=1e-4, rtol=1e-4)

    print("KERNEL_OK")
</pallas_src>

<mosaic_0001>
module attributes {stable_mosaic.version = 11 : i64} {
  func.func @qnetwork_kernel(%arg0: i32, %arg1: memref<4x128xf32, #tpu.memory_space<vmem>>, %arg2: memref<100x4xf32, #tpu.memory_space<vmem>>, %arg3: memref<8x100xf32, #tpu.memory_space<vmem>>, %arg4: memref<8x128xf32, #tpu.memory_space<vmem>>) attributes {dimension_semantics = [#tpu.dimension_semantics<parallel>], iteration_bounds = array<i64: 1>, scalar_prefetch = 0 : i64, scratch_operands = 0 : i64, tpu.core_type = #tpu.core_type<tc>, window_params = [{transform_indices = @transform_0, window_bounds = array<i64: 4, 128>}, {pipeline_mode = #tpu.pipeline_mode<synchronous>, transform_indices = @transform_1, window_bounds = array<i64: 100, 4>}, {pipeline_mode = #tpu.pipeline_mode<synchronous>, transform_indices = @transform_2, window_bounds = array<i64: 8, 100>}, {transform_indices = @transform_3, window_bounds = array<i64: 8, 128>}]} {
    %c0 = arith.constant 0 : index
    %c0_0 = arith.constant 0 : index
    %0 = vector.load %arg2[%c0, %c0_0] : memref<100x4xf32, #tpu.memory_space<vmem>>, vector<100x4xf32>
    %c0_1 = arith.constant 0 : index
    %c0_2 = arith.constant 0 : index
    %1 = vector.load %arg1[%c0_1, %c0_2] : memref<4x128xf32, #tpu.memory_space<vmem>>, vector<4x128xf32>
    %cst = arith.constant dense<0.000000e+00> : vector<100x128xf32>
    %2 = tpu.matmul %0, %1, %cst {dimension_numbers = #tpu.dot_dimension_numbers<[1], [0], [0], [1], [0, 0, 1, 1], [], []>} : vector<100x4xf32>, vector<4x128xf32>, vector<100x128xf32> -> vector<100x128xf32>
    %cst_3 = arith.constant 0.000000e+00 : f32
    %3 = vector.broadcast %cst_3 : f32 to vector<100x128xf32>
    %4 = arith.maximumf %2, %3 : vector<100x128xf32>
    %c0_4 = arith.constant 0 : index
    %c0_5 = arith.constant 0 : index
    %5 = vector.load %arg3[%c0_4, %c0_5] : memref<8x100xf32, #tpu.memory_space<vmem>>, vector<8x100xf32>
    %cst_6 = arith.constant dense<0.000000e+00> : vector<8x128xf32>
    %6 = tpu.matmul %5, %4, %cst_6 {dimension_numbers = #tpu.dot_dimension_numbers<[1], [0], [0], [1], [0, 0, 1, 1], [], []>} : vector<8x100xf32>, vector<100x128xf32>, vector<8x128xf32> -> vector<8x128xf32>
    %c0_7 = arith.constant 0 : index
    %c0_8 = arith.constant 0 : index
    %7 = vector.load %arg4[%c0_7, %c0_8] : memref<8x128xf32, #tpu.memory_space<vmem>>, vector<8x128xf32>
    tpu.vector_store %arg4[%c0_7, %c0_8], %6 {strides = array<i32>} : memref<8x128xf32, #tpu.memory_space<vmem>>, vector<8x128xf32>,
    return
  }
  func.func @transform_0(%arg0: i32) -> (i32, i32) {
    %c0_i32 = arith.constant 0 : i32
    %c0_i32_0 = arith.constant 0 : i32
    return %c0_i32, %arg0 : i32, i32
  }
  func.func @transform_1(%arg0: i32) -> (i32, i32) {
    %c0_i32 = arith.constant 0 : i32
    %c0_i32_0 = arith.constant 0 : i32
    %c0_i32_1 = arith.constant 0 : i32
    return %c0_i32, %c0_i32_0 : i32, i32
  }
  func.func @transform_2(%arg0: i32) -> (i32, i32) {
    %c0_i32 = arith.constant 0 : i32
    %c0_i32_0 = arith.constant 0 : i32
    %c0_i32_1 = arith.constant 0 : i32
    return %c0_i32, %c0_i32_0 : i32, i32
  }
  func.func @transform_3(%arg0: i32) -> (i32, i32) {
    %c0_i32 = arith.constant 0 : i32
    %c0_i32_0 = arith.constant 0 : i32
    return %c0_i32, %arg0 : i32, i32
  }
}

</mosaic_0001>

<llo_original>
// kernel: qnetwork_forward.1
$region0: #{qnetwork_forward.1}
  #allocation0 [shape = 'u32[]', space=smem, size = 0x4, offset = 0x4, fixed_abs, tag = 'smem constant byte address 0x4 - core index']
  #allocation1 [shape = 'u32[144,128]{1,0:T(1,128)}', space=vmem, size = 0x12000, scoped, tag = 'internal scratch']
  %s0 = inlined_call_operand.vmem [shape: f32[4,2], index: 0, kind: input, shape index: {}]
  %s1 = inlined_call_operand.vmem [shape: f32[100,4], index: 1, kind: input, shape index: {}]
  %s2 = inlined_call_operand.vmem [shape: f32[8,100], index: 2, kind: input, shape index: {}]
  %s3 = inlined_call_operand.vmem [shape: f32[8,2], index: 3, kind: output, shape index: {}]
  %s4 = sld [smem:[#allocation0]]
  $region22: #{qnetwork_forward.1} parent=0
    _
  %s6 = ssub.s32 1, %s4
  %s7 = scalar_select 0, %s6, %s4
  // Predicated region
  $region2: #{qnetwork_forward.1} parent=0 // pred_check
    _
  $region3: #{qnetwork_forward.1} parent=0 // pred_check_branch
    %9 = sbr.rel (0) target = $region5
  $region4: #{qnetwork_forward.1} parent=0 // pred_region
    _
  $region5: #{qnetwork_forward.1} parent=0 // pred_fallthru
    _
  // Predicated region
  $region6: #{qnetwork_forward.1} parent=0 // pred_check
    _
  $region7: #{qnetwork_forward.1} parent=0 // pred_check_branch
    %11 = sbr.rel (0) target = $region9
  $region8: #{qnetwork_forward.1} parent=0 // pred_region
    _
  $region9: #{qnetwork_forward.1} parent=0 // pred_fallthru
    _
  // Predicated region
  $region10: #{qnetwork_forward.1} parent=0 // pred_check
    _
  $region11: #{qnetwork_forward.1} parent=0 // pred_check_branch
    %13 = sbr.rel (0) target = $region13
  $region12: #{qnetwork_forward.1} parent=0 // pred_region
    _
  $region13: #{qnetwork_forward.1} parent=0 // pred_fallthru
    _
  %v14 = vld [vmem:[%s1] sm:$0xff]
  %v15 = vld [vmem:[%s1 + $0x8] sm:$0xff]
  %v16 = vld [vmem:[%s1 + $0x10] sm:$0xff]
  %v17 = vld [vmem:[%s1 + $0x18] sm:$0xff]
  %v18 = vld [vmem:[%s1 + $0x20] sm:$0xff]
  %v19 = vld [vmem:[%s1 + $0x28] sm:$0xff]
  %v20 = vld [vmem:[%s1 + $0x30] sm:$0xff]
  %v21 = vld [vmem:[%s1 + $0x38] sm:$0xff]
  %v22 = vld [vmem:[%s1 + $0x40] sm:$0xff]
  %v23 = vld [vmem:[%s1 + $0x48] sm:$0xff]
  %v24 = vld [vmem:[%s1 + $0x50] sm:$0xff]
  %v25 = vld [vmem:[%s1 + $0x58] sm:$0xff]
  %v26 = vld [vmem:[%s1 + $0x60] sm:$0xf]
  %v27 = vld [vmem:[%s0] sm:$0xf]
  %vm28 = vcmask 31744
  %v30 = vsel %vm28, %v14, 0
  %v33 = vsel %vm28, %v15, 0
  %v36 = vsel %vm28, %v16, 0
  %v39 = vsel %vm28, %v17, 0
  %v42 = vsel %vm28, %v18, 0
  %v45 = vsel %vm28, %v19, 0
  %v48 = vsel %vm28, %v20, 0
  %v51 = vsel %vm28, %v21, 0
  %v54 = vsel %vm28, %v22, 0
  %v57 = vsel %vm28, %v23, 0
  %v60 = vsel %vm28, %v24, 0
  %v63 = vsel %vm28, %v25, 0
  %v66 = vsel %vm28, %v26, 0
  %vm68 = vcmask 1043456
  %v70 = vsel %vm68, %v27, 0
  %72 = vmatprep.subr.mxu0 0.0
  %73 = vmatpush1.msra.mxu0 0.0
  %74 = vmatprep.subr.mxu0 0.0
  %75 = vmatpush1.msra.mxu0 0.0
  %76 = vmatprep.subr.mxu0 0.0
  %77 = vmatpush1.msra.mxu0 0.0
  %78 = vmatprep.subr.mxu0 0.0
  %79 = vmatpush1.msra.mxu0 0.0
  %80 = vmatprep.subr.mxu0 0.0
  %81 = vmatpush1.msra.mxu0 0.0
  %82 = vmatprep.subr.mxu0 0.0
  %83 = vmatpush1.msra.mxu0 0.0
  %84 = vmatprep.subr.mxu0 0.0
  %85 = vmatpush1.msra.mxu0 0.0
  %86 = vmatprep.subr.mxu0 0.0
  %87 = vmatpush1.msra.mxu0 0.0
  %88 = vmatprep.subr.mxu0 0.0
  %89 = vmatpush1.msra.mxu0 0.0
  %90 = vmatprep.subr.mxu0 0.0
  %91 = vmatpush1.msra.mxu0 0.0
  %92 = vmatprep.subr.mxu0 0.0
  %93 = vmatpush1.msra.mxu0 0.0
  %94 = vmatprep.subr.mxu0 0.0
  %95 = vmatpush1.msra.mxu0 0.0
  %96 = vmatprep.subr.mxu0 0.0
  %97 = vmatpush1.msra.mxu0 0.0
  %98 = vmatprep.subr.mxu0 0.0
  %99 = vmatpush1.msra.mxu0 0.0
  %100 = vmatprep.subr.mxu0 0.0
  %101 = vmatpush1.msra.mxu0 0.0
  %102 = vmatprep.subr.mxu0 0.0
  %103 = vmatpush1.msra.mxu0 %v70
  %104 = vmatprep.subr.mxu0 0.0
  %105 = vmatpush2.msra.mxu0 0.0
  %106 = vmatprep.subr.mxu0 0.0
  %107 = vmatpush2.msra.mxu0 0.0
  %108 = vmatprep.subr.mxu0 0.0
  %109 = vmatpush2.msra.mxu0 0.0
  %110 = vmatprep.subr.mxu0 0.0
  %111 = vmatpush2.msra.mxu0 0.0
  %112 = vmatprep.subr.mxu0 0.0
  %113 = vmatpush2.msra.mxu0 0.0
  %114 = vmatprep.subr.mxu0 0.0
  %115 = vmatpush2.msra.mxu0 0.0
  %116 = vmatprep.subr.mxu0 0.0
  %117 = vmatpush2.msra.mxu0 0.0
  %118 = vmatprep.subr.mxu0 0.0
  %119 = vmatpush2.msra.mxu0 0.0
  %120 = vmatprep.subr.mxu0 0.0
  %121 = vmatpush2.msra.mxu0 0.0
  %122 = vmatprep.subr.mxu0 0.0
  %123 = vmatpush2.msra.mxu0 0.0
  %124 = vmatprep.subr.mxu0 0.0
  %125 = vmatpush2.msra.mxu0 0.0
  %126 = vmatprep.subr.mxu0 0.0
  %127 = vmatpush2.msra.mxu0 0.0
  %128 = vmatprep.subr.mxu0 0.0
  %129 = vmatpush2.msra.mxu0 0.0
  %130 = vmatprep.subr.mxu0 0.0
  %131 = vmatpush2.msra.mxu0 0.0
  %132 = vmatprep.subr.mxu0 0.0
  %133 = vmatpush2.msra.mxu0 0.0
  %134 = vmatprep.subr.mxu0 0.0
  %135 = vmatpush2.msra.mxu0 0.0
  %136 = vmatprep.mubr.f32.mxu0 0.0
  %137 = vmatmul.mubr.f32.gmra.mxu0 %v30
  %v138 = vpop.f32.mrf.mxu0
  %v139 = vadd.f32 0.0, %v138
  %v140 = vpop.f32.mrf.mxu0
  %141 = vmatprep.mubr.f32.mxu0 0.0
  %142 = vmatmul.mubr.f32.gmra.mxu0 %v33
  %v143 = vpop.f32.mrf.mxu0
  %v144 = vadd.f32 0.0, %v143
  %v145 = vpop.f32.mrf.mxu0
  %146 = vmatprep.mubr.f32.mxu0 0.0
  %147 = vmatmul.mubr.f32.gmra.mxu0 %v36
  %v148 = vpop.f32.mrf.mxu0
  %v149 = vadd.f32 0.0, %v148
  %v150 = vpop.f32.mrf.mxu0
  %151 = vmatprep.mubr.f32.mxu0 0.0
  %152 = vmatmul.mubr.f32.gmra.mxu0 %v39
  %v153 = vpop.f32.mrf.mxu0
  %v154 = vadd.f32 0.0, %v153
  %v155 = vpop.f32.mrf.mxu0
  %156 = vmatprep.mubr.f32.mxu0 0.0
  %157 = vmatmul.mubr.f32.gmra.mxu0 %v42
  %v158 = vpop.f32.mrf.mxu0
  %v159 = vadd.f32 0.0, %v158
  %v160 = vpop.f32.mrf.mxu0
  %161 = vmatprep.mubr.f32.mxu0 0.0
  %162 = vmatmul.mubr.f32.gmra.mxu0 %v45
  %v163 = vpop.f32.mrf.mxu0
  %v164 = vadd.f32 0.0, %v163
  %v165 = vpop.f32.mrf.mxu0
  %166 = vmatprep.mubr.f32.mxu0 0.0
  %167 = vmatmul.mubr.f32.gmra.mxu0 %v48
  %v168 = vpop.f32.mrf.mxu0
  %v169 = vadd.f32 0.0, %v168
  %v170 = vpop.f32.mrf.mxu0
  %171 = vmatprep.mubr.f32.mxu0 0.0
  %172 = vmatmul.mubr.f32.gmra.mxu0 %v51
  %v173 = vpop.f32.mrf.mxu0
  %v174 = vadd.f32 0.0, %v173
  %v175 = vpop.f32.mrf.mxu0
  %176 = vmatprep.mubr.f32.mxu0 0.0
  %177 = vmatmul.mubr.f32.gmra.mxu0 %v54
  %v178 = vpop.f32.mrf.mxu0
  %v179 = vadd.f32 0.0, %v178
  %v180 = vpop.f32.mrf.mxu0
  %181 = vmatprep.mubr.f32.mxu0 0.0
  %182 = vmatmul.mubr.f32.gmra.mxu0 %v57
  %v183 = vpop.f32.mrf.mxu0
  %v184 = vadd.f32 0.0, %v183
  %v185 = vpop.f32.mrf.mxu0
  %186 = vmatprep.mubr.f32.mxu0 0.0
  %187 = vmatmul.mubr.f32.gmra.mxu0 %v60
  %v188 = vpop.f32.mrf.mxu0
  %v189 = vadd.f32 0.0, %v188
  %v190 = vpop.f32.mrf.mxu0
  %191 = vmatprep.mubr.f32.mxu0 0.0
  %192 = vmatmul.mubr.f32.gmra.mxu0 %v63
  %v193 = vpop.f32.mrf.mxu0
  %v194 = vadd.f32 0.0, %v193
  %v195 = vpop.f32.mrf.mxu0
  %196 = vmatprep.mubr.f32.mxu0 0.0
  %197 = vmatmul.mubr.f32.gmra.mxu0 %v66
  %v198 = vpop.f32.mrf.mxu0
  %v199 = vadd.f32 0.0, %v198
  %v200 = vpop.f32.mrf.mxu0
  %201 = vdwg.mxu0
  %v202 = vmax.f32 %v139, 0.0
  %v203 = vmax.f32 %v144, 0.0
  %v204 = vmax.f32 %v149, 0.0
  %v205 = vmax.f32 %v154, 0.0
  %v206 = vmax.f32 %v159, 0.0
  %v207 = vmax.f32 %v164, 0.0
  %v208 = vmax.f32 %v169, 0.0
  %v209 = vmax.f32 %v174, 0.0
  %v210 = vmax.f32 %v179, 0.0
  %v211 = vmax.f32 %v184, 0.0
  %v212 = vmax.f32 %v189, 0.0
  %v213 = vmax.f32 %v194, 0.0
  %v214 = vmax.f32 %v199, 0.0
  %v215 = vld [vmem:[%s2] sm:$0xff]
  %vm216 = vcmask 818176
  %v218 = vsel %vm216, %v215, 0
  %v221 = vsel %vm68, %v214, 0
  %223 = vmatprep.subr.mxu0 0.0
  %224 = vmatpush1.msra.mxu0 0.0
  %225 = vmatprep.subr.mxu0 0.0
  %226 = vmatpush1.msra.mxu0 0.0
  %227 = vmatprep.subr.mxu0 0.0
  %228 = vmatpush1.msra.mxu0 0.0
  %229 = vmatprep.subr.mxu0 0.0
  %230 = vmatpush1.msra.mxu0 %v221
  %231 = vmatprep.subr.mxu0 0.0
  %232 = vmatpush1.msra.mxu0 %v213
  %233 = vmatprep.subr.mxu0 0.0
  %234 = vmatpush1.msra.mxu0 %v212
  %235 = vmatprep.subr.mxu0 0.0
  %236 = vmatpush1.msra.mxu0 %v211
  %237 = vmatprep.subr.mxu0 0.0
  %238 = vmatpush1.msra.mxu0 %v210
  %239 = vmatprep.subr.mxu0 0.0
  %240 = vmatpush1.msra.mxu0 %v209
  %241 = vmatprep.subr.mxu0 0.0
  %242 = vmatpush1.msra.mxu0 %v208
  %243 = vmatprep.subr.mxu0 0.0
  %244 = vmatpush1.msra.mxu0 %v207
  %245 = vmatprep.subr.mxu0 0.0
  %246 = vmatpush1.msra.mxu0 %v206
  %247 = vmatprep.subr.mxu0 0.0
  %248 = vmatpush1.msra.mxu0 %v205
  %249 = vmatprep.subr.mxu0 0.0
  %250 = vmatpush1.msra.mxu0 %v204
  %251 = vmatprep.subr.mxu0 0.0
  %252 = vmatpush1.msra.mxu0 %v203
  %253 = vmatprep.subr.mxu0 0.0
  %254 = vmatpush1.msra.mxu0 %v202
  %255 = vmatprep.subr.mxu0 0.0
  %256 = vmatpush2.msra.mxu0 0.0
  %257 = vmatprep.subr.mxu0 0.0
  %258 = vmatpush2.msra.mxu0 0.0
  %259 = vmatprep.subr.mxu0 0.0
  %260 = vmatpush2.msra.mxu0 0.0
  %261 = vmatprep.subr.mxu0 0.0
  %262 = vmatpush2.msra.mxu0 0.0
  %263 = vmatprep.subr.mxu0 0.0
  %264 = vmatpush2.msra.mxu0 0.0
  %265 = vmatprep.subr.mxu0 0.0
  %266 = vmatpush2.msra.mxu0 0.0
  %267 = vmatprep.subr.mxu0 0.0
  %268 = vmatpush2.msra.mxu0 0.0
  %269 = vmatprep.subr.mxu0 0.0
  %270 = vmatpush2.msra.mxu0 0.0
  %271 = vmatprep.subr.mxu0 0.0
  %272 = vmatpush2.msra.mxu0 0.0
  %273 = vmatprep.subr.mxu0 0.0
  %274 = vmatpush2.msra.mxu0 0.0
  %275 = vmatprep.subr.mxu0 0.0
  %276 = vmatpush2.msra.mxu0 0.0
  %277 = vmatprep.subr.mxu0 0.0
  %278 = vmatpush2.msra.mxu0 0.0
  %279 = vmatprep.subr.mxu0 0.0
  %280 = vmatpush2.msra.mxu0 0.0
  %281 = vmatprep.subr.mxu0 0.0
  %282 = vmatpush2.msra.mxu0 0.0
  %283 = vmatprep.subr.mxu0 0.0
  %284 = vmatpush2.msra.mxu0 0.0
  %285 = vmatprep.subr.mxu0 0.0
  %286 = vmatpush2.msra.mxu0 0.0
  %287 = vmatprep.mubr.f32.mxu0 0.0
  %288 = vmatmul.mubr.f32.gmra.mxu0 %v218
  %v289 = vpop.f32.mrf.mxu0
  %v290 = vadd.f32 0.0, %v289
  %v291 = vpop.f32.mrf.mxu0
  %292 = vdwg.mxu0
  %293 = vst [vmem:[%s3] sm:$0xff] %v290
  // Predicated region
  $region14: #{qnetwork_forward.1} parent=0 // pred_check
    _
  $region15: #{qnetwork_forward.1} parent=0 // pred_check_branch
    %295 = sbr.rel (0) target = $region17
  $region16: #{qnetwork_forward.1} parent=0 // pred_region
    _
  $region17: #{qnetwork_forward.1} parent=0 // pred_fallthru
    _
  // Predicated region
  $region18: #{qnetwork_forward.1} parent=0 // pred_check
    _
  $region19: #{qnetwork_forward.1} parent=0 // pred_check_branch
    %297 = sbr.rel (0) target = $region21
  $region20: #{qnetwork_forward.1} parent=0 // pred_region
    _
  $region21: #{qnetwork_forward.1} parent=0 // pred_fallthru
    _

</llo_original>
